<compile_context>
chip_gen: v7x
topology: tpu7x:2x2x1
jax: 0.10.0
libtpu: 0.0.40
codegen_flags: <defaults>
</compile_context>

<pallas_src>
import jax
import jax.numpy as jnp
from jax.experimental import pallas as pl
from jax.experimental.pallas import tpu as pltpu

_EPS = 1e-5


def _stats_kernel(x_ref, w_ref, stats_ref):
    """Pass 1: accumulate per-channel sum(y) and sum(y*y) with y = W @ x."""
    @pl.when(jnp.logical_and(pl.program_id(0) == 0, pl.program_id(1) == 0))
    def _():
        stats_ref[...] = jnp.zeros_like(stats_ref)

    x = x_ref[...].astype(jnp.float32)                       # (C, TL)
    w = w_ref[...].astype(jnp.float32)                       # (C, C)
    y = jnp.dot(w, x, preferred_element_type=jnp.float32)    # (C, TL)
    stats_ref[...] += jnp.concatenate(
        [jnp.sum(y, axis=1, keepdims=True),
         jnp.sum(y * y, axis=1, keepdims=True)],
        axis=1,
    )                                                        # (C, 2)


def _norm_kernel(x_ref, w_ref, scale_ref, shift_ref, o_ref):
    """Pass 2: o = x + (W @ x) * scale + shift  (scale/shift are (C, 1))."""
    x = x_ref[...].astype(jnp.float32)                       # (C, TL)
    w = w_ref[...].astype(jnp.float32)                       # (C, C)
    y = jnp.dot(w, x, preferred_element_type=jnp.float32)    # (C, TL)
    o_ref[...] = (x + y * scale_ref[...] + shift_ref[...]).astype(o_ref.dtype)


def _pick_tile_len(L):
    """Largest tile length that evenly divides L, is lane-aligned (multiple of
    128) or the full extent, and keeps per-tile VMEM use modest."""
    if L % 128 != 0:
        return L                     # full extent (allowed by the (8,128) rule)
    for tl in (2048, 1024, 512, 256, 128):
        if L % tl == 0:
            return tl
    return L


def residual_block(x, w, b, gamma, beta):
    """x: (N, C, L).  w: (C, C) 1x1-conv weight (w[co, ci]).
    b: conv bias (unused -- BN's mean subtraction cancels it exactly).
    gamma/beta: BN affine parameters, shape (C,)."""
    del b  # exactly cancelled by training-mode BatchNorm's mean subtraction
    N, C, L = x.shape
    TL = _pick_tile_len(L)
    grid = (N, L // TL)

    w2 = w.reshape(C, C).astype(jnp.float32)

    # ---- Pass 1: global per-channel sum / sum-of-squares of y = W @ x ------
    stats = pl.pallas_call(
        _stats_kernel,
        out_shape=jax.ShapeDtypeStruct((C, 2), jnp.float32),
        grid=grid,
        in_specs=[
            pl.BlockSpec((None, C, TL), lambda n, lt: (n, 0, lt)),
            pl.BlockSpec((C, C), lambda n, lt: (0, 0)),
        ],
        out_specs=pl.BlockSpec((C, 2), lambda n, lt: (0, 0)),
        compiler_params=pltpu.CompilerParams(
            dimension_semantics=("arbitrary", "arbitrary")),
        cost_estimate=pl.CostEstimate(
            flops=2 * N * L * C * C + 3 * N * L * C,
            transcendentals=0,
            bytes_accessed=N * C * L * x.dtype.itemsize + C * C * 4 + C * 2 * 4),
    )(x, w2)

    # ---- Finalize BN stats (tiny (C,) vectors; plain XLA glue) --------------
    count = jnp.float32(N * L)
    gamma_f = gamma.astype(jnp.float32)
    beta_f = beta.astype(jnp.float32)
    mean = stats[:, 0] / count
    var = jnp.maximum(stats[:, 1] / count - mean * mean, 0.0)   # biased variance
    inv = jax.lax.rsqrt(var + _EPS)
    scale = (gamma_f * inv).reshape(C, 1)
    shift = (beta_f - mean * gamma_f * inv).reshape(C, 1)

    # ---- Pass 2: out = x + (W @ x) * scale + shift --------------------------
    out = pl.pallas_call(
        _norm_kernel,
        out_shape=jax.ShapeDtypeStruct((N, C, L), x.dtype),
        grid=grid,
        in_specs=[
            pl.BlockSpec((None, C, TL), lambda n, lt: (n, 0, lt)),
            pl.BlockSpec((C, C), lambda n, lt: (0, 0)),
            pl.BlockSpec((C, 1), lambda n, lt: (0, 0)),
            pl.BlockSpec((C, 1), lambda n, lt: (0, 0)),
        ],
        out_specs=pl.BlockSpec((None, C, TL), lambda n, lt: (n, 0, lt)),
        compiler_params=pltpu.CompilerParams(
            dimension_semantics=("parallel", "parallel")),
        cost_estimate=pl.CostEstimate(
            flops=2 * N * L * C * C + 3 * N * L * C,
            transcendentals=0,
            bytes_accessed=2 * N * C * L * x.dtype.itemsize + C * C * 4),
    )(x, w2, scale, shift)

    return out


if __name__ == "__main__":
    key = jax.random.PRNGKey(0)
    N, C, L = 2, 4, 16  # batch, channels, length (Conv1d/BatchNorm1d => NCL)

    kx, kw, kb = jax.random.split(key, 3)
    x = jax.random.normal(kx, (N, C, L), dtype=jnp.float32)

    # Synthetic parameters with shapes from Conv1d(C, C, 1) + BatchNorm1d(C).
    bound = 1.0 / jnp.sqrt(jnp.float32(C))
    w = jax.random.uniform(kw, (C, C), minval=-bound, maxval=bound, dtype=jnp.float32)
    b = jax.random.uniform(kb, (C,), minval=-bound, maxval=bound, dtype=jnp.float32)
    gamma = jnp.ones((C,), dtype=jnp.float32)   # BatchNorm1d default weight
    beta = jnp.zeros((C,), dtype=jnp.float32)   # BatchNorm1d default bias

    out = jax.jit(residual_block)(x, w, b, gamma, beta)
    jax.block_until_ready(out)

    # Pure-JAX reference of the original module math (1x1 conv WITH bias,
    # training-mode BN with biased variance + eps=1e-5, residual add).
    # The kernel omits the bias since BN's mean subtraction cancels it exactly.
    y_ref = jnp.einsum("oc,ncl->nol", w, x) + b[None, :, None]
    mean = jnp.mean(y_ref, axis=(0, 2), keepdims=True)
    var = jnp.mean((y_ref - mean) ** 2, axis=(0, 2), keepdims=True)
    ref = x + (y_ref - mean) / jnp.sqrt(var + _EPS) * gamma[None, :, None] + beta[None, :, None]

    assert out.shape == (N, C, L)
    assert jnp.max(jnp.abs(out - ref)) < 1e-4
    print("KERNEL_OK")
</pallas_src>

<mosaic_0001>
module attributes {stable_mosaic.version = 11 : i64} {
  func.func @_stats_kernel(%arg0: i32, %arg1: i32, %arg2: memref<1x4x16xf32, #tpu.memory_space<vmem>>, %arg3: memref<4x4xf32, #tpu.memory_space<vmem>>, %arg4: memref<4x2xf32, #tpu.memory_space<vmem>>) attributes {dimension_semantics = [#tpu.dimension_semantics<arbitrary>, #tpu.dimension_semantics<arbitrary>], iteration_bounds = array<i64: 2, 1>, scalar_prefetch = 0 : i64, scratch_operands = 0 : i64, tpu.core_type = #tpu.core_type<tc>, window_params = [{transform_indices = @transform_0, window_bounds = array<i64: 1, 4, 16>}, {pipeline_mode = #tpu.pipeline_mode<synchronous>, transform_indices = @transform_1, window_bounds = array<i64: 4, 4>}, {pipeline_mode = #tpu.pipeline_mode<synchronous>, transform_indices = @transform_2, window_bounds = array<i64: 4, 2>}]} {
    %c0_i32 = arith.constant 0 : i32
    %0 = arith.cmpi eq, %arg0, %c0_i32 : i32
    %c0_i32_0 = arith.constant 0 : i32
    %1 = arith.cmpi eq, %arg1, %c0_i32_0 : i32
    %2 = arith.andi %0, %1 : i1
    %3 = arith.extui %2 : i1 to i32
    %c0_i32_1 = arith.constant 0 : i32
    %4 = arith.cmpi ne, %3, %c0_i32_1 : i32
    scf.if %4 {
      %cst_12 = arith.constant 0.000000e+00 : f32
      %18 = vector.broadcast %cst_12 : f32 to vector<4x2xf32>
      %c0_13 = arith.constant 0 : index
      %c0_14 = arith.constant 0 : index
      %19 = vector.load %arg4[%c0_13, %c0_14] : memref<4x2xf32, #tpu.memory_space<vmem>>, vector<4x2xf32>
      tpu.vector_store %arg4[%c0_13, %c0_14], %18 {strides = array<i32>} : memref<4x2xf32, #tpu.memory_space<vmem>>, vector<4x2xf32>,
    } else {
    }
    %c0 = arith.constant 0 : index
    %c0_2 = arith.constant 0 : index
    %c0_3 = arith.constant 0 : index
    %5 = vector.load %arg2[%c0, %c0_2, %c0_3] : memref<1x4x16xf32, #tpu.memory_space<vmem>>, vector<1x4x16xf32>
    %6 = vector.shape_cast %5 : vector<1x4x16xf32> to vector<4x16xf32>
    %c0_4 = arith.constant 0 : index
    %c0_5 = arith.constant 0 : index
    %7 = vector.load %arg3[%c0_4, %c0_5] : memref<4x4xf32, #tpu.memory_space<vmem>>, vector<4x4xf32>
    %cst = arith.constant dense<0.000000e+00> : vector<4x16xf32>
    %8 = tpu.matmul %7, %6, %cst {dimension_numbers = #tpu.dot_dimension_numbers<[1], [0], [0], [1], [0, 0, 1, 1], [], []>} : vector<4x4xf32>, vector<4x16xf32>, vector<4x16xf32> -> vector<4x16xf32>
    %c0_6 = arith.constant 0 : index
    %c0_7 = arith.constant 0 : index
    %9 = vector.load %arg4[%c0_6, %c0_7] : memref<4x2xf32, #tpu.memory_space<vmem>>, vector<4x2xf32>
    %cst_8 = arith.constant dense<0.000000e+00> : vector<4xf32>
    %10 = vector.multi_reduction <add>, %8, %cst_8 [1] : vector<4x16xf32> to vector<4xf32>
    %11 = vector.shape_cast %10 : vector<4xf32> to vector<4x1xf32>
    %12 = arith.mulf %8, %8 : vector<4x16xf32>
    %cst_9 = arith.constant dense<0.000000e+00> : vector<4xf32>
    %13 = vector.multi_reduction <add>, %12, %cst_9 [1] : vector<4x16xf32> to vector<4xf32>
    %14 = vector.shape_cast %13 : vector<4xf32> to vector<4x1xf32>
    %15 = tpu.concatenate %11, %14 in 1 : vector<4x1xf32>, vector<4x1xf32> -> vector<4x2xf32>
    %16 = arith.addf %9, %15 : vector<4x2xf32>
    %c0_10 = arith.constant 0 : index
    %c0_11 = arith.constant 0 : index
    %17 = vector.load %arg4[%c0_10, %c0_11] : memref<4x2xf32, #tpu.memory_space<vmem>>, vector<4x2xf32>
    tpu.vector_store %arg4[%c0_10, %c0_11], %16 {strides = array<i32>} : memref<4x2xf32, #tpu.memory_space<vmem>>, vector<4x2xf32>,
    return
  }
  func.func @transform_0(%arg0: i32, %arg1: i32) -> (i32, i32, i32) {
    %c0_i32 = arith.constant 0 : i32
    %c0_i32_0 = arith.constant 0 : i32
    return %arg0, %c0_i32, %arg1 : i32, i32, i32
  }
  func.func @transform_1(%arg0: i32, %arg1: i32) -> (i32, i32) {
    %c0_i32 = arith.constant 0 : i32
    %c0_i32_0 = arith.constant 0 : i32
    %c0_i32_1 = arith.constant 0 : i32
    return %c0_i32, %c0_i32_0 : i32, i32
  }
  func.func @transform_2(%arg0: i32, %arg1: i32) -> (i32, i32) {
    %c0_i32 = arith.constant 0 : i32
    %c0_i32_0 = arith.constant 0 : i32
    %c0_i32_1 = arith.constant 0 : i32
    return %c0_i32, %c0_i32_0 : i32, i32
  }
}

module attributes {stable_mosaic.version = 11 : i64} {
  func.func @_norm_kernel(%arg0: i32, %arg1: i32, %arg2: memref<1x4x16xf32, #tpu.memory_space<vmem>>, %arg3: memref<4x4xf32, #tpu.memory_space<vmem>>, %arg4: memref<4x1xf32, #tpu.memory_space<vmem>>, %arg5: memref<4x1xf32, #tpu.memory_space<vmem>>, %arg6: memref<1x4x16xf32, #tpu.memory_space<vmem>>) attributes {dimension_semantics = [#tpu.dimension_semantics<parallel>, #tpu.dimension_semantics<parallel>], iteration_bounds = array<i64: 2, 1>, scalar_prefetch = 0 : i64, scratch_operands = 0 : i64, tpu.core_type = #tpu.core_type<tc>, window_params = [{transform_indices = @transform_0, window_bounds = array<i64: 1, 4, 16>}, {pipeline_mode = #tpu.pipeline_mode<synchronous>, transform_indices = @transform_1, window_bounds = array<i64: 4, 4>}, {pipeline_mode = #tpu.pipeline_mode<synchronous>, transform_indices = @transform_2, window_bounds = array<i64: 4, 1>}, {pipeline_mode = #tpu.pipeline_mode<synchronous>, transform_indices = @transform_3, window_bounds = array<i64: 4, 1>}, {transform_indices = @transform_4, window_bounds = array<i64: 1, 4, 16>}]} {
    %c0 = arith.constant 0 : index
    %c0_0 = arith.constant 0 : index
    %c0_1 = arith.constant 0 : index
    %0 = vector.load %arg2[%c0, %c0_0, %c0_1] : memref<1x4x16xf32, #tpu.memory_space<vmem>>, vector<1x4x16xf32>
    %1 = vector.shape_cast %0 : vector<1x4x16xf32> to vector<4x16xf32>
    %c0_2 = arith.constant 0 : index
    %c0_3 = arith.constant 0 : index
    %2 = vector.load %arg3[%c0_2, %c0_3] : memref<4x4xf32, #tpu.memory_space<vmem>>, vector<4x4xf32>
    %cst = arith.constant dense<0.000000e+00> : vector<4x16xf32>
    %3 = tpu.matmul %2, %1, %cst {dimension_numbers = #tpu.dot_dimension_numbers<[1], [0], [0], [1], [0, 0, 1, 1], [], []>} : vector<4x4xf32>, vector<4x16xf32>, vector<4x16xf32> -> vector<4x16xf32>
    %c0_4 = arith.constant 0 : index
    %c0_5 = arith.constant 0 : index
    %4 = vector.load %arg4[%c0_4, %c0_5] : memref<4x1xf32, #tpu.memory_space<vmem>>, vector<4x1xf32>
    %5 = vector.broadcast %4 : vector<4x1xf32> to vector<4x16xf32>
    %6 = arith.mulf %3, %5 : vector<4x16xf32>
    %7 = arith.addf %1, %6 : vector<4x16xf32>
    %c0_6 = arith.constant 0 : index
    %c0_7 = arith.constant 0 : index
    %8 = vector.load %arg5[%c0_6, %c0_7] : memref<4x1xf32, #tpu.memory_space<vmem>>, vector<4x1xf32>
    %9 = vector.broadcast %8 : vector<4x1xf32> to vector<4x16xf32>
    %10 = arith.addf %7, %9 : vector<4x16xf32>
    %c0_8 = arith.constant 0 : index
    %c0_9 = arith.constant 0 : index
    %c0_10 = arith.constant 0 : index
    %11 = vector.load %arg6[%c0_8, %c0_9, %c0_10] : memref<1x4x16xf32, #tpu.memory_space<vmem>>, vector<1x4x16xf32>
    %12 = vector.shape_cast %11 : vector<1x4x16xf32> to vector<4x16xf32>
    %13 = vector.shape_cast %10 : vector<4x16xf32> to vector<1x4x16xf32>
    tpu.vector_store %arg6[%c0_8, %c0_9, %c0_10], %13 {strides = array<i32>} : memref<1x4x16xf32, #tpu.memory_space<vmem>>, vector<1x4x16xf32>,
    return
  }
  func.func @transform_0(%arg0: i32, %arg1: i32) -> (i32, i32, i32) {
    %c0_i32 = arith.constant 0 : i32
    %c0_i32_0 = arith.constant 0 : i32
    return %arg0, %c0_i32, %arg1 : i32, i32, i32
  }
  func.func @transform_1(%arg0: i32, %arg1: i32) -> (i32, i32) {
    %c0_i32 = arith.constant 0 : i32
    %c0_i32_0 = arith.constant 0 : i32
    %c0_i32_1 = arith.constant 0 : i32
    return %c0_i32, %c0_i32_0 : i32, i32
  }
  func.func @transform_2(%arg0: i32, %arg1: i32) -> (i32, i32) {
    %c0_i32 = arith.constant 0 : i32
    %c0_i32_0 = arith.constant 0 : i32
    %c0_i32_1 = arith.constant 0 : i32
    return %c0_i32, %c0_i32_0 : i32, i32
  }
  func.func @transform_3(%arg0: i32, %arg1: i32) -> (i32, i32) {
    %c0_i32 = arith.constant 0 : i32
    %c0_i32_0 = arith.constant 0 : i32
    %c0_i32_1 = arith.constant 0 : i32
    return %c0_i32, %c0_i32_0 : i32, i32
  }
  func.func @transform_4(%arg0: i32, %arg1: i32) -> (i32, i32, i32) {
    %c0_i32 = arith.constant 0 : i32
    %c0_i32_0 = arith.constant 0 : i32
    return %arg0, %c0_i32, %arg1 : i32, i32, i32
  }
}

</mosaic_0001>

<llo_original>
// kernel: residual_block.2
$region0: #{residual_block.2}
  #allocation0 [shape = 'u32[]', space=smem, size = 0x4, offset = 0x4, fixed_abs, tag = 'smem constant byte address 0x4 - core index']
  #allocation1 [shape = 'u32[144,128]{1,0:T(1,128)}', space=vmem, size = 0x12000, scoped, tag = 'internal scratch']
  %s0 = inlined_call_operand.hbm [shape: f32[2,4,16], index: 0, kind: input, shape index: {}]
  %s1 = inlined_call_operand.vmem [shape: f32[4,4], index: 1, kind: input, shape index: {}]
  %s2 = inlined_call_operand.vmem [shape: f32[4,2], index: 2, kind: output, shape index: {}]
  %s3 = sld [smem:[#allocation0]]
  $region49: #{residual_block.2} parent=0
    _
  %s5 = ssub.s32 1, %s3
  %s6 = scalar_select 0, %s5, %s3
  $region1: #{residual_block.2} parent=0
    #allocation2 [shape = 'u8[4096]{0}', space=vmem, size = 0x1000, scoped, tag = 'input window, operand 0']
    #allocation3 [shape = 's32[2]{0}', space=sflag, size = 0x8, scoped, tag = 'scoped memory for residual_block.2']
    %7 = vsyncpa [#allocation3], 0
    %s8 = scalar_lea.sflag [#allocation3], 1
    %9 = vsyncpa %s8, 0
    loop: start=0, step=1, limit=4
    $region2: #{residual_block.2} parent=1 // loop_pre_header
      _
    $region3: #{residual_block.2} parent=1 // loop_header
      %s11 = sphi 0, %s15
      %p12 = scmp.ge.s32.totalorder %s11, 4
      %s18 = sphi 0, %s30
      %s19 = sphi 0, %s26
      %s20 = sphi 0, %s18
      %s21 = sphi 0, %s19
      %s22 = sphi 0, %s20
      %s23 = sphi 0, %s21
      %s35 = sphi 0, %s37
      %s38 = sphi 0, %s35
      %s39 = sphi 0, %s38
      %s55 = sphi 0, %s39
      %s59 = sphi 0, %s59
      %s61 = sphi 0, %s59
      %s62 = sphi 0, %s61
      %s76 = sphi 0, %s62
      %s80 = sphi 0, %s80
      %s82 = sphi 0, %s80
      %s83 = sphi 0, %s82
      %s97 = sphi 0, %s83
    $region4: #{residual_block.2} parent=1 // loop_header_branch
      %14 = sbr.rel (%p12) target = $region8
    $region5: #{residual_block.2} parent=1 // loop_body
      %s16 = ssub.s32 %s11, 1
      %s17 = ssub.s32 %s11, 2
      %s24 = sadd.s32 1, %s19
      %p25 = scmp.ge.s32.totalorder %s24, 1
      %s26 = scalar_select %p25, 0, %s24
      %s27 = sadd.s32 1, %s18
      %s28 = scalar_select %p25, %s27, %s18
      %p29 = scmp.ge.s32.totalorder %s28, 2
      %s30 = scalar_select %p29, 0, %s28
      %s31 = ssub.s32 %s18, %s30
      %s32 = ssub.s32 %s19, %s26
      %s33 = sor.u32 %s31, %s32
      %p34 = scmp.eq.s32.totalorder %s33, 0
      %s36 = sadd.s32 %s35, 1
      %s37 = scalar_select %p34, %s35, %s36
      %p40 = pneg %p34
      %p41 = scmp.eq.s32.totalorder %s11, 1
      %p42 = por %p40, %p41
      %p43 = scmp.ne.s32.totalorder %s35, %s38
      %p44 = scmp.eq.s32.totalorder %s11, 0
      %p45 = por %p43, %p44
      %p46 = scmp.ne.s32.totalorder %s35, %s38
      %p47 = scmp.eq.s32.totalorder %s16, 1
      %p48 = por %p46, %p47
      %p49 = scmp.ne.s32.totalorder %s38, %s39
      %p50 = scmp.eq.s32.totalorder %s16, 0
      %p51 = por %p49, %p50
      %p52 = scmp.ne.s32.totalorder %s38, %s39
      %p53 = scmp.eq.s32.totalorder %s17, 1
      %p54 = por %p52, %p53
      %p56 = scmp.ne.s32.totalorder %s39, %s55
      %p57 = scmp.eq.s32.totalorder %s17, 0
      %p58 = por %p56, %p57
      %s60 = sadd.s32 %s59, 1
      %p63 = scmp.eq.s32.totalorder %s11, 1
      %p64 = scmp.ne.s32.totalorder %s59, %s61
      %p65 = scmp.eq.s32.totalorder %s11, 0
      %p66 = por %p64, %p65
      %p67 = scmp.ne.s32.totalorder %s59, %s61
      %p68 = scmp.eq.s32.totalorder %s16, 1
      %p69 = por %p67, %p68
      %p70 = scmp.ne.s32.totalorder %s61, %s62
      %p71 = scmp.eq.s32.totalorder %s16, 0
      %p72 = por %p70, %p71
      %p73 = scmp.ne.s32.totalorder %s61, %s62
      %p74 = scmp.eq.s32.totalorder %s17, 1
      %p75 = por %p73, %p74
      %p77 = scmp.ne.s32.totalorder %s62, %s76
      %p78 = scmp.eq.s32.totalorder %s17, 0
      %p79 = por %p77, %p78
      %s81 = sadd.s32 %s80, 1
      %p84 = scmp.eq.s32.totalorder %s11, 1
      %p85 = scmp.ne.s32.totalorder %s80, %s82
      %p86 = scmp.eq.s32.totalorder %s11, 0
      %p87 = por %p85, %p86
      %p88 = scmp.ne.s32.totalorder %s80, %s82
      %p89 = scmp.eq.s32.totalorder %s16, 1
      %p90 = por %p88, %p89
      %p91 = scmp.ne.s32.totalorder %s82, %s83
      %p92 = scmp.eq.s32.totalorder %s16, 0
      %p93 = por %p91, %p92
      %p94 = scmp.ne.s32.totalorder %s82, %s83
      %p95 = scmp.eq.s32.totalorder %s17, 1
      %p96 = por %p94, %p95
      %p98 = scmp.ne.s32.totalorder %s83, %s97
      %p99 = scmp.eq.s32.totalorder %s17, 0
      %p100 = por %p98, %p99
      %p101 = scmp.le.s32.totalorder 1, %s11
      %p102 = scmp.lt.s32.totalorder %s11, 3
      %p103 = pnand %p101, %p102
      %p104 = pneg %p103
      // Predicated region
      $region9: #{residual_block.2} parent=5 // pred_check
        _
      $region10: #{residual_block.2} parent=5 // pred_check_branch
        %106 = sbr.rel (%p103) target = $region12
      $region11: #{residual_block.2} parent=5 // pred_region
        %s107 = ssub.s32 %s11, 1
        // Predicated region
        $region13: #{residual_block.2} parent=11 // pred_check
          %p108 = pneg %p72
        $region14: #{residual_block.2} parent=11 // pred_check_branch
          %110 = sbr.rel (%p108) target = $region16
        $region15: #{residual_block.2} parent=11 // pred_region
          _
        $region16: #{residual_block.2} parent=11 // pred_fallthru
          _
      $region12: #{residual_block.2} parent=5 // pred_fallthru
        _
      %p111 = scmp.lt.s32.totalorder %s11, 2
      // Predicated region
      $region17: #{residual_block.2} parent=5 // pred_check
        %p112 = pneg %p111
      $region18: #{residual_block.2} parent=5 // pred_check_branch
        %114 = sbr.rel (%p112) target = $region20
      $region19: #{residual_block.2} parent=5 // pred_region
        // Predicated region
        $region21: #{residual_block.2} parent=19 // pred_check
          %p115 = pneg %p45
        $region22: #{residual_block.2} parent=19 // pred_check_branch
          %117 = sbr.rel (%p115) target = $region24
        $region23: #{residual_block.2} parent=19 // pred_region
          %s118 = sand.u32 %s35, 1
          %s119 = scalar_lea.sflag [#allocation3], %s118
          %s120 = sand.u32 %s35, 1
          %s121 = smul.addr %s120, 4
          %s122 = scalar_lea.vmem [#allocation2], %s121
          %s124 = ssub.s32 64, 64
          %125 = vsyncadd %s119, %s124
          %s126 = sadd.s32 %s19, %s18
          %s127 = smul.addr %s126, 64
          %s128 = scalar_lea.hbm %s0, %s127
          %s130 = sshll.u32 %s122, 4
          %s131 = int_to_ptr.vmem [resolvable:$true] %s130
          %133 = dma.hbm_to_vmem [thread:$0]  %s128, 64, %s131, %s119
        $region24: #{residual_block.2} parent=19 // pred_fallthru
          _
      $region20: #{residual_block.2} parent=5 // pred_fallthru
        _
      %p134 = scmp.le.s32.totalorder 1, %s11
      %p135 = scmp.lt.s32.totalorder %s11, 3
      %p136 = pnand %p134, %p135
      %p137 = pneg %p136
      // Predicated region
      $region25: #{residual_block.2} parent=5 // pred_check
        _
      $region26: #{residual_block.2} parent=5 // pred_check_branch
        %139 = sbr.rel (%p136) target = $region28
      $region27: #{residual_block.2} parent=5 // pred_region
        %s140 = ssub.s32 %s11, 1
        %s141 = sand.u32 %s38, 1
        %s142 = scalar_lea.sflag [#allocation3], %s141
        %s143 = sand.u32 %s38, 1
        %s144 = smul.addr %s143, 4
        %s145 = scalar_lea.vmem [#allocation2], %s144
        // Predicated region
        $region29: #{residual_block.2} parent=27 // pred_check
          %p146 = pneg %p51
        $region30: #{residual_block.2} parent=27 // pred_check_branch
          %148 = sbr.rel (%p146) target = $region32
        $region31: #{residual_block.2} parent=27 // pred_region
          %149 = dma.done %s142, 64
        $region32: #{residual_block.2} parent=27 // pred_fallthru
          _
        %s150 = sand.u32 %s38, 1
        %s151 = scalar_lea.sflag [#allocation3], %s150
        %s152 = sand.u32 %s38, 1
        %s153 = smul.addr %s152, 4
        %s154 = scalar_lea.vmem [#allocation2], %s153
        %p155 = pneg %p51
        %p156 = pneg %p48
        %p157 = pneg %p72
        %p158 = pneg %p69
        %p159 = pneg %p93
        %p160 = pneg %p90
        %p161 = scmp.eq.s32.totalorder %s20, 0
        %p162 = scmp.eq.s32.totalorder %s21, 0
        %p163 = pnand %p161, %p162
        %p164 = pneg %p163
        // Predicated region
        $region33: #{residual_block.2} parent=27 // pred_check
          _
        $region34: #{residual_block.2} parent=27 // pred_check_branch
          %166 = sbr.rel (%p163) target = $region36
        $region35: #{residual_block.2} parent=27 // pred_region
          %vm167 = vcmask 11264
          %168 = vst.msk [vmem:[%s2] sm:$0xf] %vm167, 0.0
        $region36: #{residual_block.2} parent=27 // pred_fallthru
          _
        %v169 = vld [vmem:[%s145] sm:$0xf]
        %v170 = vld [vmem:[%s1] sm:$0xf]
        %vm171 = vcmask 31744
        %v173 = vsel %vm171, %v170, 0
        %vm175 = vcmask 1043456
        %v177 = vsel %vm175, %v169, 0
        %179 = vmatprep.subr.mxu0 0.0
        %180 = vmatpush1.msra.mxu0 %v177
        %181 = vmatprep.subr.mxu0 0.0
        %182 = vmatpush1.msra.mxu0 0.0
        %183 = vmatprep.subr.mxu0 0.0
        %184 = vmatpush1.msra.mxu0 0.0
        %185 = vmatprep.subr.mxu0 0.0
        %186 = vmatpush1.msra.mxu0 0.0
        %187 = vmatprep.subr.mxu0 0.0
        %188 = vmatpush1.msra.mxu0 0.0
        %189 = vmatprep.subr.mxu0 0.0
        %190 = vmatpush1.msra.mxu0 0.0
        %191 = vmatprep.subr.mxu0 0.0
        %192 = vmatpush1.msra.mxu0 0.0
        %193 = vmatprep.subr.mxu0 0.0
        %194 = vmatpush1.msra.mxu0 0.0
        %195 = vmatprep.subr.mxu0 0.0
        %196 = vmatpush1.msra.mxu0 0.0
        %197 = vmatprep.subr.mxu0 0.0
        %198 = vmatpush1.msra.mxu0 0.0
        %199 = vmatprep.subr.mxu0 0.0
        %200 = vmatpush1.msra.mxu0 0.0
        %201 = vmatprep.subr.mxu0 0.0
        %202 = vmatpush1.msra.mxu0 0.0
        %203 = vmatprep.subr.mxu0 0.0
        %204 = vmatpush1.msra.mxu0 0.0
        %205 = vmatprep.subr.mxu0 0.0
        %206 = vmatpush1.msra.mxu0 0.0
        %207 = vmatprep.subr.mxu0 0.0
        %208 = vmatpush1.msra.mxu0 0.0
        %209 = vmatprep.subr.mxu0 0.0
        %210 = vmatpush1.msra.mxu0 0.0
        %211 = vmatprep.subr.mxu0 0.0
        %212 = vmatpush1.msra.mxu0 0.0
        %213 = vmatprep.subr.mxu0 0.0
        %214 = vmatpush1.msra.mxu0 0.0
        %215 = vmatprep.subr.mxu0 0.0
        %216 = vmatpush1.msra.mxu0 0.0
        %217 = vmatprep.subr.mxu0 0.0
        %218 = vmatpush1.msra.mxu0 0.0
        %219 = vmatprep.subr.mxu0 0.0
        %220 = vmatpush1.msra.mxu0 0.0
        %221 = vmatprep.subr.mxu0 0.0
        %222 = vmatpush1.msra.mxu0 0.0
        %223 = vmatprep.subr.mxu0 0.0
        %224 = vmatpush1.msra.mxu0 0.0
        %225 = vmatprep.subr.mxu0 0.0
        %226 = vmatpush1.msra.mxu0 0.0
        %227 = vmatprep.subr.mxu0 0.0
        %228 = vmatpush1.msra.mxu0 0.0
        %229 = vmatprep.subr.mxu0 0.0
        %230 = vmatpush1.msra.mxu0 0.0
        %231 = vmatprep.subr.mxu0 0.0
        %232 = vmatpush1.msra.mxu0 0.0
        %233 = vmatprep.subr.mxu0 0.0
        %234 = vmatpush1.msra.mxu0 0.0
        %235 = vmatprep.subr.mxu0 0.0
        %236 = vmatpush1.msra.mxu0 0.0
        %237 = vmatprep.subr.mxu0 0.0
        %238 = vmatpush1.msra.mxu0 0.0
        %239 = vmatprep.subr.mxu0 0.0
        %240 = vmatpush1.msra.mxu0 0.0
        %241 = vmatprep.subr.mxu0 0.0
        %242 = vmatpush1.msra.mxu0 0.0
        %243 = vmatprep.mubr.f32.mxu0 0.0
        %244 = vmatmul.mubr.f32.gmra.mrb[0].mxu0 %v173
        %v245 = vpop.f32.mrb[0].mxu0
        %v246 = vadd.f32 0.0, %v245
        %v247 = vpop.f32.mrb[0].mxu0
        %248 = vdwg.mxu0
        %v249 = vld [vmem:[%s2] sm:$0xf]
        %vm250 = vcmask 125952
        %v251 = vsel %vm250, %v246, 0.0
        %252 = vadd.xlane.f32.xlu0 %v251
        %v253 = vpop.xlane.xlu0 %252
        %v254 = vmul.f32 %v246, %v246
        %v255 = vsel %vm250, %v254, 0.0
        %256 = vadd.xlane.f32.xlu0 %v255
        %v257 = vpop.xlane.xlu0 %256
        %vm258 = vcmask 7168
        %v259 = vsel %vm258, %v253, %v257
        %v260 = vadd.f32 %v249, %v259
        %vm261 = vcmask 11264
        %262 = vst.msk [vmem:[%s2] sm:$0xf] %vm261, %v260
        // Predicated region
        $region37: #{residual_block.2} parent=27 // pred_check
          %p263 = pneg %p90
        $region38: #{residual_block.2} parent=27 // pred_check_branch
          %265 = sbr.rel (%p263) target = $region40
        $region39: #{residual_block.2} parent=27 // pred_region
          _
        $region40: #{residual_block.2} parent=27 // pred_fallthru
          _
        // Predicated region
        $region41: #{residual_block.2} parent=27 // pred_check
          %p266 = pneg %p90
        $region42: #{residual_block.2} parent=27 // pred_check_branch
          %268 = sbr.rel (%p266) target = $region44
        $region43: #{residual_block.2} parent=27 // pred_region
          _
        $region44: #{residual_block.2} parent=27 // pred_fallthru
          _
      $region28: #{residual_block.2} parent=5 // pred_fallthru
        _
      %p269 = scmp.le.s32.totalorder 2, %s11
      // Predicated region
      $region45: #{residual_block.2} parent=5 // pred_check
        %p270 = pneg %p269
      $region46: #{residual_block.2} parent=5 // pred_check_branch
        %272 = sbr.rel (%p270) target = $region48
      $region47: #{residual_block.2} parent=5 // pred_region
        %s273 = ssub.s32 %s11, 2
      $region48: #{residual_block.2} parent=5 // pred_fallthru
        _
    $region6: #{residual_block.2} parent=1 // loop_footer
      %s15 = sadd.s32 1, %s11
    $region7: #{residual_block.2} parent=1 // loop_footer_branch
      %10 = sbr.rel target = $region3
    $region8: #{residual_block.2} parent=1 // loop_exit
      _
    %274 = vsyncpa [#allocation3], 1
    %s275 = scalar_lea.sflag [#allocation3], 1
    %276 = vsyncpa %s275, 1

// kernel: residual_block.3
$region0: #{residual_block.3}
  #allocation0 [shape = 'u32[]', space=smem, size = 0x4, offset = 0x4, fixed_abs, tag = 'smem constant byte address 0x4 - core index']
  #allocation1 [shape = 'u32[144,128]{1,0:T(1,128)}', space=vmem, size = 0x12000, scoped, tag = 'internal scratch']
  %s0 = inlined_call_operand.vmem [shape: f32[2,4,16], index: 0, kind: input, shape index: {}]
  %s1 = inlined_call_operand.vmem [shape: f32[4,4], index: 1, kind: input, shape index: {}]
  %s2 = inlined_call_operand.vmem [shape: f32[4,1], index: 2, kind: input, shape index: {}]
  %s3 = inlined_call_operand.vmem [shape: f32[4,1], index: 3, kind: input, shape index: {}]
  %s4 = inlined_call_operand.hbm [shape: f32[2,4,16], index: 4, kind: output, shape index: {}]
  %s5 = sld [smem:[#allocation0]]
  $region49: #{residual_block.3} parent=0
    _
  %s7 = ssub.s32 1, %s5
  %s8 = scalar_select 0, %s7, %s5
  $region1: #{residual_block.3} parent=0
    #allocation2 [shape = 'u8[4096]{0}', space=vmem, size = 0x1000, scoped, tag = 'output window, operand 0']
    #allocation3 [shape = 's32[2]{0}', space=sflag, size = 0x8, scoped, tag = 'scoped memory for residual_block.3']
    %9 = vsyncpa [#allocation3], 0
    %s10 = scalar_lea.sflag [#allocation3], 1
    %11 = vsyncpa %s10, 0
    loop: start=0, step=1, limit=4
    $region2: #{residual_block.3} parent=1 // loop_pre_header
      _
    $region3: #{residual_block.3} parent=1 // loop_header
      %s13 = sphi 0, %s17
      %p14 = scmp.ge.s32.totalorder %s13, 4
      %s20 = sphi 0, %s32
      %s21 = sphi 0, %s28
      %s22 = sphi 0, %s20
      %s23 = sphi 0, %s21
      %s24 = sphi 0, %s22
      %s25 = sphi 0, %s23
      %s37 = sphi 0, %s39
      %s40 = sphi 0, %s37
      %s41 = sphi 0, %s40
      %s57 = sphi 0, %s41
      %s61 = sphi 0, %s61
      %s63 = sphi 0, %s61
      %s64 = sphi 0, %s63
      %s78 = sphi 0, %s64
      %s82 = sphi 0, %s82
      %s84 = sphi 0, %s82
      %s85 = sphi 0, %s84
      %s99 = sphi 0, %s85
      %s103 = sphi 0, %s103
      %s105 = sphi 0, %s103
      %s106 = sphi 0, %s105
      %s120 = sphi 0, %s106
      %s128 = sphi 0, %s130
      %s131 = sphi 0, %s128
      %s132 = sphi 0, %s131
      %s148 = sphi 0, %s132
    $region4: #{residual_block.3} parent=1 // loop_header_branch
      %16 = sbr.rel (%p14) target = $region8
    $region5: #{residual_block.3} parent=1 // loop_body
      %s18 = ssub.s32 %s13, 1
      %s19 = ssub.s32 %s13, 2
      %s26 = sadd.s32 1, %s21
      %p27 = scmp.ge.s32.totalorder %s26, 1
      %s28 = scalar_select %p27, 0, %s26
      %s29 = sadd.s32 1, %s20
      %s30 = scalar_select %p27, %s29, %s20
      %p31 = scmp.ge.s32.totalorder %s30, 2
      %s32 = scalar_select %p31, 0, %s30
      %s33 = ssub.s32 %s20, %s32
      %s34 = ssub.s32 %s21, %s28
      %s35 = sor.u32 %s33, %s34
      %p36 = scmp.eq.s32.totalorder %s35, 0
      %s38 = sadd.s32 %s37, 1
      %s39 = scalar_select %p36, %s37, %s38
      %p42 = pneg %p36
      %p43 = scmp.eq.s32.totalorder %s13, 1
      %p44 = por %p42, %p43
      %p45 = scmp.ne.s32.totalorder %s37, %s40
      %p46 = scmp.eq.s32.totalorder %s13, 0
      %p47 = por %p45, %p46
      %p48 = scmp.ne.s32.totalorder %s37, %s40
      %p49 = scmp.eq.s32.totalorder %s18, 1
      %p50 = por %p48, %p49
      %p51 = scmp.ne.s32.totalorder %s40, %s41
      %p52 = scmp.eq.s32.totalorder %s18, 0
      %p53 = por %p51, %p52
      %p54 = scmp.ne.s32.totalorder %s40, %s41
      %p55 = scmp.eq.s32.totalorder %s19, 1
      %p56 = por %p54, %p55
      %p58 = scmp.ne.s32.totalorder %s41, %s57
      %p59 = scmp.eq.s32.totalorder %s19, 0
      %p60 = por %p58, %p59
      %s62 = sadd.s32 %s61, 1
      %p65 = scmp.eq.s32.totalorder %s13, 1
      %p66 = scmp.ne.s32.totalorder %s61, %s63
      %p67 = scmp.eq.s32.totalorder %s13, 0
      %p68 = por %p66, %p67
      %p69 = scmp.ne.s32.totalorder %s61, %s63
      %p70 = scmp.eq.s32.totalorder %s18, 1
      %p71 = por %p69, %p70
      %p72 = scmp.ne.s32.totalorder %s63, %s64
      %p73 = scmp.eq.s32.totalorder %s18, 0
      %p74 = por %p72, %p73
      %p75 = scmp.ne.s32.totalorder %s63, %s64
      %p76 = scmp.eq.s32.totalorder %s19, 1
      %p77 = por %p75, %p76
      %p79 = scmp.ne.s32.totalorder %s64, %s78
      %p80 = scmp.eq.s32.totalorder %s19, 0
      %p81 = por %p79, %p80
      %s83 = sadd.s32 %s82, 1
      %p86 = scmp.eq.s32.totalorder %s13, 1
      %p87 = scmp.ne.s32.totalorder %s82, %s84
      %p88 = scmp.eq.s32.totalorder %s13, 0
      %p89 = por %p87, %p88
      %p90 = scmp.ne.s32.totalorder %s82, %s84
      %p91 = scmp.eq.s32.totalorder %s18, 1
      %p92 = por %p90, %p91
      %p93 = scmp.ne.s32.totalorder %s84, %s85
      %p94 = scmp.eq.s32.totalorder %s18, 0
      %p95 = por %p93, %p94
      %p96 = scmp.ne.s32.totalorder %s84, %s85
      %p97 = scmp.eq.s32.totalorder %s19, 1
      %p98 = por %p96, %p97
      %p100 = scmp.ne.s32.totalorder %s85, %s99
      %p101 = scmp.eq.s32.totalorder %s19, 0
      %p102 = por %p100, %p101
      %s104 = sadd.s32 %s103, 1
      %p107 = scmp.eq.s32.totalorder %s13, 1
      %p108 = scmp.ne.s32.totalorder %s103, %s105
      %p109 = scmp.eq.s32.totalorder %s13, 0
      %p110 = por %p108, %p109
      %p111 = scmp.ne.s32.totalorder %s103, %s105
      %p112 = scmp.eq.s32.totalorder %s18, 1
      %p113 = por %p111, %p112
      %p114 = scmp.ne.s32.totalorder %s105, %s106
      %p115 = scmp.eq.s32.totalorder %s18, 0
      %p116 = por %p114, %p115
      %p117 = scmp.ne.s32.totalorder %s105, %s106
      %p118 = scmp.eq.s32.totalorder %s19, 1
      %p119 = por %p117, %p118
      %p121 = scmp.ne.s32.totalorder %s106, %s120
      %p122 = scmp.eq.s32.totalorder %s19, 0
      %p123 = por %p121, %p122
      %s124 = ssub.s32 %s20, %s32
      %s125 = ssub.s32 %s21, %s28
      %s126 = sor.u32 %s124, %s125
      %p127 = scmp.eq.s32.totalorder %s126, 0
      %s129 = sadd.s32 %s128, 1
      %s130 = scalar_select %p127, %s128, %s129
      %p133 = pneg %p127
      %p134 = scmp.eq.s32.totalorder %s13, 1
      %p135 = por %p133, %p134
      %p136 = scmp.ne.s32.totalorder %s128, %s131
      %p137 = scmp.eq.s32.totalorder %s13, 0
      %p138 = por %p136, %p137
      %p139 = scmp.ne.s32.totalorder %s128, %s131
      %p140 = scmp.eq.s32.totalorder %s18, 1
      %p141 = por %p139, %p140
      %p142 = scmp.ne.s32.totalorder %s131, %s132
      %p143 = scmp.eq.s32.totalorder %s18, 0
      %p144 = por %p142, %p143
      %p145 = scmp.ne.s32.totalorder %s131, %s132
      %p146 = scmp.eq.s32.totalorder %s19, 1
      %p147 = por %p145, %p146
      %p149 = scmp.ne.s32.totalorder %s132, %s148
      %p150 = scmp.eq.s32.totalorder %s19, 0
      %p151 = por %p149, %p150
      %p152 = scmp.le.s32.totalorder 1, %s13
      %p153 = scmp.lt.s32.totalorder %s13, 3
      %p154 = pnand %p152, %p153
      %p155 = pneg %p154
      // Predicated region
      $region9: #{residual_block.3} parent=5 // pred_check
        _
      $region10: #{residual_block.3} parent=5 // pred_check_branch
        %157 = sbr.rel (%p154) target = $region12
      $region11: #{residual_block.3} parent=5 // pred_region
        %s158 = ssub.s32 %s13, 1
        // Predicated region
        $region13: #{residual_block.3} parent=11 // pred_check
          %p159 = pneg %p74
        $region14: #{residual_block.3} parent=11 // pred_check_branch
          %161 = sbr.rel (%p159) target = $region16
        $region15: #{residual_block.3} parent=11 // pred_region
          _
        $region16: #{residual_block.3} parent=11 // pred_fallthru
          _
        // Predicated region
        $region17: #{residual_block.3} parent=11 // pred_check
          %p162 = pneg %p95
        $region18: #{residual_block.3} parent=11 // pred_check_branch
          %164 = sbr.rel (%p162) target = $region20
        $region19: #{residual_block.3} parent=11 // pred_region
          _
        $region20: #{residual_block.3} parent=11 // pred_fallthru
          _
        // Predicated region
        $region21: #{residual_block.3} parent=11 // pred_check
          %p165 = pneg %p116
        $region22: #{residual_block.3} parent=11 // pred_check_branch
          %167 = sbr.rel (%p165) target = $region24
        $region23: #{residual_block.3} parent=11 // pred_region
          _
        $region24: #{residual_block.3} parent=11 // pred_fallthru
          _
      $region12: #{residual_block.3} parent=5 // pred_fallthru
        _
      %p168 = scmp.lt.s32.totalorder %s13, 2
      // Predicated region
      $region25: #{residual_block.3} parent=5 // pred_check
        %p169 = pneg %p168
      $region26: #{residual_block.3} parent=5 // pred_check_branch
        %171 = sbr.rel (%p169) target = $region28
      $region27: #{residual_block.3} parent=5 // pred_region
        // Predicated region
        $region29: #{residual_block.3} parent=27 // pred_check
          %p172 = pneg %p47
        $region30: #{residual_block.3} parent=27 // pred_check_branch
          %174 = sbr.rel (%p172) target = $region32
        $region31: #{residual_block.3} parent=27 // pred_region
          %p175 = scmp.lt.s32.totalorder %s20, 1
          %s176 = scalar_select %p175, %s20, 1
          %p177 = scmp.lt.s32.totalorder %s21, 0
          %s178 = scalar_select %p177, %s21, 0
          %s179 = sadd.s32 %s178, %s176
          %s180 = smul.addr %s179, 4
          %s181 = scalar_lea.vmem %s0, %s180
        $region32: #{residual_block.3} parent=27 // pred_fallthru
          _
      $region28: #{residual_block.3} parent=5 // pred_fallthru
        _
      %p182 = scmp.le.s32.totalorder 1, %s13
      %p183 = scmp.lt.s32.totalorder %s13, 3
      %p184 = pnand %p182, %p183
      %p185 = pneg %p184
      // Predicated region
      $region33: #{residual_block.3} parent=5 // pred_check
        _
      $region34: #{residual_block.3} parent=5 // pred_check_branch
        %187 = sbr.rel (%p184) target = $region36
      $region35: #{residual_block.3} parent=5 // pred_region
        %s188 = ssub.s32 %s13, 1
        %p189 = scmp.lt.s32.totalorder %s22, 1
        %s190 = scalar_select %p189, %s22, 1
        %p191 = scmp.lt.s32.totalorder %s23, 0
        %s192 = scalar_select %p191, %s23, 0
        %s193 = sadd.s32 %s192, %s190
        %s194 = smul.addr %s193, 4
        %s195 = scalar_lea.vmem %s0, %s194
        %p196 = pneg %p53
        %p197 = pneg %p50
        %p198 = pneg %p74
        %p199 = pneg %p71
        %p200 = pneg %p95
        %p201 = pneg %p92
        %p202 = pneg %p116
        %p203 = pneg %p113
        %p204 = pneg %p144
        %p205 = pneg %p141
        %s206 = sand.u32 %s131, 1
        %s207 = scalar_lea.sflag [#allocation3], %s206
        %s208 = sand.u32 %s131, 1
        %s209 = smul.addr %s208, 4
        %s210 = scalar_lea.vmem [#allocation2], %s209
        %p211 = scmp.lt.s32.totalorder %s22, 1
        %s212 = scalar_select %p211, %s22, 1
        %p213 = scmp.lt.s32.totalorder %s23, 0
        %s214 = scalar_select %p213, %s23, 0
        %s215 = sadd.s32 %s214, %s212
        %s216 = smul.addr %s215, 4
        %s217 = scalar_lea.vmem %s0, %s216
        %v218 = vld [vmem:[%s217] sm:$0xf]
        %v219 = vld [vmem:[%s1] sm:$0xf]
        %vm220 = vcmask 31744
        %v222 = vsel %vm220, %v219, 0
        %vm224 = vcmask 1043456
        %v226 = vsel %vm224, %v218, 0
        %228 = vmatprep.subr.mxu0 0.0
        %229 = vmatpush1.msra.mxu0 %v226
        %230 = vmatprep.subr.mxu0 0.0
        %231 = vmatpush1.msra.mxu0 0.0
        %232 = vmatprep.subr.mxu0 0.0
        %233 = vmatpush1.msra.mxu0 0.0
        %234 = vmatprep.subr.mxu0 0.0
        %235 = vmatpush1.msra.mxu0 0.0
        %236 = vmatprep.subr.mxu0 0.0
        %237 = vmatpush1.msra.mxu0 0.0
        %238 = vmatprep.subr.mxu0 0.0
        %239 = vmatpush1.msra.mxu0 0.0
        %240 = vmatprep.subr.mxu0 0.0
        %241 = vmatpush1.msra.mxu0 0.0
        %242 = vmatprep.subr.mxu0 0.0
        %243 = vmatpush1.msra.mxu0 0.0
        %244 = vmatprep.subr.mxu0 0.0
        %245 = vmatpush1.msra.mxu0 0.0
        %246 = vmatprep.subr.mxu0 0.0
        %247 = vmatpush1.msra.mxu0 0.0
        %248 = vmatprep.subr.mxu0 0.0
        %249 = vmatpush1.msra.mxu0 0.0
        %250 = vmatprep.subr.mxu0 0.0
        %251 = vmatpush1.msra.mxu0 0.0
        %252 = vmatprep.subr.mxu0 0.0
        %253 = vmatpush1.msra.mxu0 0.0
        %254 = vmatprep.subr.mxu0 0.0
        %255 = vmatpush1.msra.mxu0 0.0
        %256 = vmatprep.subr.mxu0 0.0
        %257 = vmatpush1.msra.mxu0 0.0
        %258 = vmatprep.subr.mxu0 0.0
        %259 = vmatpush1.msra.mxu0 0.0
        %260 = vmatprep.subr.mxu0 0.0
        %261 = vmatpush1.msra.mxu0 0.0
        %262 = vmatprep.subr.mxu0 0.0
        %263 = vmatpush1.msra.mxu0 0.0
        %264 = vmatprep.subr.mxu0 0.0
        %265 = vmatpush1.msra.mxu0 0.0
        %266 = vmatprep.subr.mxu0 0.0
        %267 = vmatpush1.msra.mxu0 0.0
        %268 = vmatprep.subr.mxu0 0.0
        %269 = vmatpush1.msra.mxu0 0.0
        %270 = vmatprep.subr.mxu0 0.0
        %271 = vmatpush1.msra.mxu0 0.0
        %272 = vmatprep.subr.mxu0 0.0
        %273 = vmatpush1.msra.mxu0 0.0
        %274 = vmatprep.subr.mxu0 0.0
        %275 = vmatpush1.msra.mxu0 0.0
        %276 = vmatprep.subr.mxu0 0.0
        %277 = vmatpush1.msra.mxu0 0.0
        %278 = vmatprep.subr.mxu0 0.0
        %279 = vmatpush1.msra.mxu0 0.0
        %280 = vmatprep.subr.mxu0 0.0
        %281 = vmatpush1.msra.mxu0 0.0
        %282 = vmatprep.subr.mxu0 0.0
        %283 = vmatpush1.msra.mxu0 0.0
        %284 = vmatprep.subr.mxu0 0.0
        %285 = vmatpush1.msra.mxu0 0.0
        %286 = vmatprep.subr.mxu0 0.0
        %287 = vmatpush1.msra.mxu0 0.0
        %288 = vmatprep.subr.mxu0 0.0
        %289 = vmatpush1.msra.mxu0 0.0
        %290 = vmatprep.subr.mxu0 0.0
        %291 = vmatpush1.msra.mxu0 0.0
        %292 = vmatprep.mubr.f32.mxu0 0.0
        %293 = vmatmul.mubr.f32.gmra.mrb[0].mxu0 %v222
        %v294 = vpop.f32.mrb[0].mxu0
        %v295 = vadd.f32 0.0, %v294
        %v296 = vpop.f32.mrb[0].mxu0
        %297 = vdwg.mxu0
        %v298 = vld [vmem:[%s2] sm:$0xf]
        %300 = vset.pattern.permute.xlu0 0
        %301 = vperm.xlu0 %300, %v298
        %v302 = vpop.permute.xlu0 %301
        %v304 = vmul.f32 %v295, %v302
        %v305 = vadd.f32 %v218, %v304
        %v306 = vld [vmem:[%s3] sm:$0xf]
        %308 = vset.pattern.permute.xlu0 0
        %309 = vperm.xlu0 %308, %v306
        %v310 = vpop.permute.xlu0 %309
        %v312 = vadd.f32 %v305, %v310
        %vm313 = vcmask 125952
        %314 = vst.msk [vmem:[%s210] sm:$0xf] %vm313, %v312
        %s315 = sand.u32 %s131, 1
        %s316 = scalar_lea.sflag [#allocation3], %s315
        %s317 = sand.u32 %s131, 1
        %s318 = smul.addr %s317, 4
        %s319 = scalar_lea.vmem [#allocation2], %s318
        // Predicated region
        $region37: #{residual_block.3} parent=35 // pred_check
          %p320 = pneg %p141
        $region38: #{residual_block.3} parent=35 // pred_check_branch
          %322 = sbr.rel (%p320) target = $region40
        $region39: #{residual_block.3} parent=35 // pred_region
          %s324 = ssub.s32 64, 64
          %325 = vsyncadd %s316, %s324
          %s326 = sadd.s32 %s23, %s22
          %s327 = smul.addr %s326, 64
          %s328 = scalar_lea.hbm %s4, %s327
          %s330 = sshll.u32 %s319, 4
          %s331 = int_to_ptr.vmem [resolvable:$true] %s330
          %333 = dma.vmem_to_hbm [thread:$0]  %s331, 64, %s328, %s316
        $region40: #{residual_block.3} parent=35 // pred_fallthru
          _
      $region36: #{residual_block.3} parent=5 // pred_fallthru
        _
      %p334 = scmp.le.s32.totalorder 2, %s13
      // Predicated region
      $region41: #{residual_block.3} parent=5 // pred_check
        %p335 = pneg %p334
      $region42: #{residual_block.3} parent=5 // pred_check_branch
        %337 = sbr.rel (%p335) target = $region44
      $region43: #{residual_block.3} parent=5 // pred_region
        %s338 = ssub.s32 %s13, 2
        // Predicated region
        $region45: #{residual_block.3} parent=43 // pred_check
          %p339 = pneg %p147
        $region46: #{residual_block.3} parent=43 // pred_check_branch
          %341 = sbr.rel (%p339) target = $region48
        $region47: #{residual_block.3} parent=43 // pred_region
          %s342 = sand.u32 %s132, 1
          %s343 = scalar_lea.sflag [#allocation3], %s342
          %s344 = sand.u32 %s132, 1
          %s345 = smul.addr %s344, 4
          %s346 = scalar_lea.vmem [#allocation2], %s345
          %347 = dma.done %s343, 64
        $region48: #{residual_block.3} parent=43 // pred_fallthru
          _
      $region44: #{residual_block.3} parent=5 // pred_fallthru
        _
    $region6: #{residual_block.3} parent=1 // loop_footer
      %s17 = sadd.s32 1, %s13
    $region7: #{residual_block.3} parent=1 // loop_footer_branch
      %12 = sbr.rel target = $region3
    $region8: #{residual_block.3} parent=1 // loop_exit
      _
    %348 = vsyncpa [#allocation3], 1
    %s349 = scalar_lea.sflag [#allocation3], 1
    %350 = vsyncpa %s349, 1

</llo_original>
